<compile_context>
chip_gen: v7x
topology: tpu7x:2x2x1
jax: 0.10.0
libtpu: 0.0.40
codegen_flags: <defaults>
</compile_context>

<pallas_src>
import functools
import math

import numpy as np

import jax
import jax.numpy as jnp
from jax.experimental import pallas as pl
from jax.experimental.pallas import tpu as pltpu


# ----------------------------------------------------------------------------
# Generation-aware VMEM budget and tile selection
# ----------------------------------------------------------------------------
@functools.lru_cache(maxsize=None)
def _vmem_limit_bytes():
    """~75% of physical VMEM: ~48 MiB on v7x (64 MiB part), ~96 MiB on v5e/v6e."""
    cap = 128 * 1024 * 1024
    try:
        info = pltpu.get_tpu_info()
        cap = int(getattr(info, "vmem_capacity_bytes", cap) or cap)
    except Exception:
        pass  # fall back to the conservative 128 MiB assumption
    return int(min(cap * 3 // 4, 100 * 1024 * 1024))


def _pick_tile(n, candidates=(512, 256, 128)):
    """Largest candidate tile that divides n, else the full extent."""
    for c in candidates:
        if n % c == 0:
            return c
    return n


def _attn_tiles(S, img_w):
    """(tq, tk): q tile = multiple of the image width, k tile = multiple of 128.

    Caps raised to tq<=1024 / tk<=2048 (sweep range from the perf review) so the
    grid-step count — and its fixed per-step overhead — drops 4-8x at SAM scale.
    """
    if S <= 1024:
        return S, S
    step = (img_w * 8) // math.gcd(img_w, 8)          # lcm(img_w, 8)
    tq = (min(1024, S) // step) * step
    while tq >= step and S % tq != 0:
        tq -= step
    if tq < step or S % tq != 0:
        tq = S
    tk = (min(2048, S) // 128) * 128
    while tk >= 128 and S % tk != 0:
        tk -= 128
    if tk < 128 or S % tk != 0:
        tk = S
    return tq, tk


# ----------------------------------------------------------------------------
# Kernel 1: tiled linear (qkv projection)
# ----------------------------------------------------------------------------
def _linear_kernel(x_ref, w_ref, b_ref, o_ref, acc_ref, *, compute_dtype):
    @pl.when(pl.program_id(2) == 0)
    def _init():
        acc_ref[...] = jnp.zeros_like(acc_ref)

    acc_ref[...] += jnp.dot(
        x_ref[...].astype(compute_dtype),
        w_ref[...].astype(compute_dtype),
        preferred_element_type=jnp.float32,
    )

    @pl.when(pl.program_id(2) == pl.num_programs(2) - 1)
    def _finalize():
        o_ref[...] = (acc_ref[...] + b_ref[...].astype(jnp.float32)).astype(o_ref.dtype)


def pallas_linear(x2d, w, b, compute_dtype=jnp.bfloat16, out_dtype=None):
    """x2d: (M, K), w: (K, N), b: (1, N) -> (M, N) in out_dtype."""
    M, K = x2d.shape
    N = w.shape[1]
    out_dtype = x2d.dtype if out_dtype is None else out_dtype
    tm = _pick_tile(M)
    tn = _pick_tile(N, (512, 256, 128))
    tk = _pick_tile(K, (512, 256))
    kernel = functools.partial(_linear_kernel, compute_dtype=compute_dtype)
    cost = pl.CostEstimate(
        flops=int(2 * M * N * K),
        transcendentals=0,
        bytes_accessed=int(x2d.nbytes + w.nbytes + b.nbytes
                           + M * N * np.dtype(out_dtype).itemsize),
    )
    return pl.pallas_call(
        kernel,
        out_shape=jax.ShapeDtypeStruct((M, N), out_dtype),
        grid=(M // tm, N // tn, K // tk),
        in_specs=[
            pl.BlockSpec((tm, tk), lambda i, j, k: (i, k)),
            pl.BlockSpec((tk, tn), lambda i, j, k: (k, j)),
            pl.BlockSpec((1, tn), lambda i, j, k: (0, j)),
        ],
        out_specs=pl.BlockSpec((tm, tn), lambda i, j, k: (i, j)),
        scratch_shapes=[pltpu.VMEM((tm, tn), jnp.float32)],
        compiler_params=pltpu.CompilerParams(
            dimension_semantics=("parallel", "parallel", "arbitrary"),
            vmem_limit_bytes=_vmem_limit_bytes(),
        ),
        cost_estimate=cost,
    )(x2d, w, b)


# ----------------------------------------------------------------------------
# Kernel 2: fused flash attention + decomposed rel-pos + head-merge + out proj
# ----------------------------------------------------------------------------
def _attn_proj_kernel(q_ref, k_ref, v_ref, rh_ref, rw_ref, w_ref, b_ref,
                      y_ref, qs_sc, relh_sc, relw_sc, m_sc, l_sc, acc_sc, y_sc,
                      *, scale, img_w, compute_dtype):
    h = pl.program_id(2)
    ki = pl.program_id(3)
    num_heads = pl.num_programs(2)
    num_k = pl.num_programs(3)
    cd = compute_dtype

    tq, hd = qs_sc.shape
    tk = k_ref.shape[0]
    Kh = relh_sc.shape[1]
    Kw = relw_sc.shape[1]

    @pl.when(ki == 0)
    def _init():
        # Per-(b, q-tile, head) setup, hoisted out of the key loop:
        # scaled q and the compact rel-pos terms (both fed to the MXU in cd),
        # plus the running softmax statistics.
        q = q_ref[...].astype(jnp.float32)                       # (tq, hd)
        qs_sc[...] = (q * scale).astype(cd)
        rows = tq // img_w
        qc = q.reshape(rows, img_w, hd).astype(cd)
        rh = rh_ref[...].astype(cd)                              # (rows, Kh, hd)
        rw = rw_ref[...].astype(cd)                              # (img_w, Kw, hd)
        # rel_h[h, w, kh] = sum_c q[h, w, c] * Rh[h, kh, c]  (batched MXU matmul)
        rel_h = jnp.einsum("hwc,hkc->hwk", qc, rh,
                           preferred_element_type=jnp.float32)
        # rel_w[h, w, kw] = sum_c q[h, w, c] * Rw[w, kw, c]  (batched MXU matmul)
        rel_w = jnp.einsum("hwc,wkc->hwk", qc, rw,
                           preferred_element_type=jnp.float32)
        relh_sc[...] = rel_h.reshape(tq, Kh).astype(cd)
        relw_sc[...] = rel_w.reshape(tq, Kw).astype(cd)
        m_sc[...] = jnp.full(m_sc.shape, -jnp.inf, m_sc.dtype)
        l_sc[...] = jnp.zeros_like(l_sc)
        acc_sc[...] = jnp.zeros_like(acc_sc)

    # --- scores for this key tile (f32 accumulation on the MXU) --------------
    k = k_ref[...].astype(cd)                                    # (tk, hd)
    s = jnp.einsum("qd,kd->qk", qs_sc[...], k,
                   preferred_element_type=jnp.float32)           # (tq, tk)

    # Decomposed rel-pos bias: 0/1 selection matrices generated in-kernel with
    # iota compares (no per-step HBM DMA), expanded with MXU matmuls in cd.
    k0 = ki * tk
    kh_i = jax.lax.broadcasted_iota(jnp.int32, (Kh, tk), 0)
    kcol = k0 + jax.lax.broadcasted_iota(jnp.int32, (Kh, tk), 1)
    sel_h = (kcol // img_w == kh_i).astype(cd)                   # (Kh, tk)
    kw_i = jax.lax.broadcasted_iota(jnp.int32, (Kw, tk), 0)
    kcol2 = k0 + jax.lax.broadcasted_iota(jnp.int32, (Kw, tk), 1)
    sel_w = (kcol2 % img_w == kw_i).astype(cd)                   # (Kw, tk)
    # TODO(synk): fuse q_scaled|rel_h|rel_w vs k|sel_h|sel_w into one
    # deep-contraction matmul (lane-dim concatenate) once unaligned lane
    # concatenation is verified for small head dims on all target generations.
    s = s + jnp.dot(relh_sc[...], sel_h, preferred_element_type=jnp.float32)
    s = s + jnp.dot(relw_sc[...], sel_w, preferred_element_type=jnp.float32)

    # --- online softmax (all VPU/EUP math kept in f32) ------------------------
    m_prev = m_sc[...]
    m_new = jnp.maximum(m_prev, jnp.max(s, axis=-1, keepdims=True))
    alpha = jnp.exp(m_prev - m_new)
    p = jnp.exp(s - m_new)
    l_sc[...] = alpha * l_sc[...] + jnp.sum(p, axis=-1, keepdims=True)
    acc_sc[...] = alpha * acc_sc[...] + jnp.dot(
        p.astype(cd), v_ref[...].astype(cd), preferred_element_type=jnp.float32)
    m_sc[...] = m_new

    # --- per-head finalize: normalize, project with the resident w_proj slab,
    #     accumulate over heads in VMEM, store the lane-dense (tq, C) output ---
    @pl.when(ki == num_k - 1)
    def _finalize():
        inv_l = pl.reciprocal(l_sc[...], approx=True)            # EUP, not VALU
        o_head = (acc_sc[...] * inv_l).astype(cd)                # (tq, hd)
        w_h = w_ref[h].astype(cd)                                # (hd, C) resident
        contrib = jnp.dot(o_head, w_h, preferred_element_type=jnp.float32)

        @pl.when(h == 0)
        def _zero():
            y_sc[...] = jnp.zeros_like(y_sc)

        y_sc[...] += contrib

        @pl.when(h == num_heads - 1)
        def _store():
            y_ref[...] = (y_sc[...] + b_ref[...].astype(jnp.float32)
                          ).astype(y_ref.dtype)


def pallas_attention_proj(q, k, v, Rh, Rw, wp, b_proj, scale, img_h, img_w,
                          compute_dtype=jnp.bfloat16, out_dtype=jnp.float32):
    """q/k/v: (B, nh, S, hd); wp: (nh, hd, C); returns y: (B, S, C)."""
    B, nh, S, hd = q.shape
    Kh = Rh.shape[1]
    Kw = Rw.shape[1]
    C = wp.shape[2]
    tq, tk = _attn_tiles(S, img_w)
    assert tq % img_w == 0 and S % tq == 0 and S % tk == 0
    nq, nk = S // tq, S // tk

    kernel = functools.partial(_attn_proj_kernel, scale=scale, img_w=img_w,
                               compute_dtype=compute_dtype)
    cost = pl.CostEstimate(
        flops=int(B * nh * (2 * S * S * (2 * hd + Kh + Kw)
                            + 2 * S * (Kh + Kw) * hd
                            + 2 * S * hd * C)),
        transcendentals=int(B * nh * S * (S + 2)),
        bytes_accessed=int(q.nbytes + nq * (k.nbytes + v.nbytes)
                           + Rh.nbytes + Rw.nbytes + wp.nbytes + b_proj.nbytes
                           + B * S * C * np.dtype(out_dtype).itemsize),
    )
    return pl.pallas_call(
        kernel,
        out_shape=jax.ShapeDtypeStruct((B, S, C), out_dtype),
        grid=(B, nq, nh, nk),
        in_specs=[
            pl.BlockSpec((pl.Squeezed(), pl.Squeezed(), tq, hd),
                         lambda b, qi, h, ki: (b, h, qi, 0)),          # q
            pl.BlockSpec((pl.Squeezed(), pl.Squeezed(), tk, hd),
                         lambda b, qi, h, ki: (b, h, ki, 0)),          # k
            pl.BlockSpec((pl.Squeezed(), pl.Squeezed(), tk, hd),
                         lambda b, qi, h, ki: (b, h, ki, 0)),          # v
            pl.BlockSpec((tq // img_w, Kh, hd),
                         lambda b, qi, h, ki: (qi, 0, 0)),             # Rh rows
            pl.BlockSpec((img_w, Kw, hd),
                         lambda b, qi, h, ki: (0, 0, 0)),              # Rw (resident)
            pl.BlockSpec((nh, hd, C),
                         lambda b, qi, h, ki: (0, 0, 0)),              # w_proj (resident)
            pl.BlockSpec((1, C), lambda b, qi, h, ki: (0, 0)),         # b_proj (resident)
        ],
        out_specs=pl.BlockSpec((pl.Squeezed(), tq, C),
                               lambda b, qi, h, ki: (b, qi, 0)),       # lane-dense y
        scratch_shapes=[
            pltpu.VMEM((tq, hd), compute_dtype),   # scaled q (hoisted)
            pltpu.VMEM((tq, Kh), compute_dtype),   # rel_h for this q tile
            pltpu.VMEM((tq, Kw), compute_dtype),   # rel_w for this q tile
            pltpu.VMEM((tq, 1), jnp.float32),      # running max
            pltpu.VMEM((tq, 1), jnp.float32),      # running sum
            pltpu.VMEM((tq, hd), jnp.float32),     # per-head output accumulator
            pltpu.VMEM((tq, C), jnp.float32),      # projected output accumulator
        ],
        compiler_params=pltpu.CompilerParams(
            dimension_semantics=("parallel", "parallel", "arbitrary", "arbitrary"),
            vmem_limit_bytes=_vmem_limit_bytes(),
        ),
        cost_estimate=cost,
    )(q, k, v, Rh, Rw, wp, b_proj)


# ----------------------------------------------------------------------------
# Glue (parameter setup, head split) -- plain JAX
# ----------------------------------------------------------------------------
def get_rel_pos_jax(q_size, k_size, rel_pos):
    """Static gather of relative positional embeddings (q_size == k_size here)."""
    max_rel_dist = int(2 * max(q_size, k_size) - 1)
    # TODO(synk): F.interpolate(mode='linear') resize branch not implemented;
    # not reachable when rel_pos tables are sized exactly 2*size-1 (as in the module).
    assert rel_pos.shape[0] == max_rel_dist
    q_coords = jnp.arange(q_size)[:, None] * max(k_size / q_size, 1.0)
    k_coords = jnp.arange(k_size)[None, :] * max(q_size / k_size, 1.0)
    rel = q_coords - k_coords + (k_size - 1) * max(q_size / k_size, 1.0)
    return rel_pos[rel.astype(jnp.int32)]                 # (q_size, k_size, head_dim)


def attention_forward(x, params, num_heads, compute_dtype=jnp.bfloat16):
    """Pallas-backed forward of Attention(dim, num_heads, use_rel_pos=True)."""
    B, H, W, C = x.shape
    hd = C // num_heads
    S = H * W
    scale = hd ** (-0.5)

    # qkv projection (tiled Pallas GEMM); bf16 HBM intermediate by default.
    # TODO(synk): fuse the qkv projection into the attention kernel (inner
    # emit_pipeline over C) to remove this HBM round-trip entirely on v5e.
    store_dtype = (x.dtype if np.dtype(compute_dtype) == np.dtype(jnp.float32)
                   else np.dtype(compute_dtype))
    x2d = x.reshape(B * S, C)
    qkv = pallas_linear(x2d, params["w_qkv"], params["b_qkv"],
                        compute_dtype=compute_dtype, out_dtype=store_dtype)

    # head split (glue).
    # TODO(synk): pad/pack the head dim to a lane-dense (>=128) width inside the
    # kernel BlockSpecs; at hd < 128 per-head column blocks would violate the
    # (8, 128) BlockSpec tiling rule, so this split stays in XLA for now.
    qkv = qkv.reshape(B, S, 3, num_heads, hd).transpose(2, 0, 3, 1, 4)
    q, k, v = qkv[0], qkv[1], qkv[2]                      # each (B, nh, S, hd)

    # compact rel-pos tables (no repeat/tile row expansion)
    Rh = get_rel_pos_jax(H, H, params["rel_pos_h"])       # (H, Kh, hd)
    Rw = get_rel_pos_jax(W, W, params["rel_pos_w"])       # (W, Kw, hd)
    wp = params["w_proj"].reshape(num_heads, hd, C)       # per-head weight slabs

    # fused flash attention + rel-pos bias + head merge + output projection
    y = pallas_attention_proj(q, k, v, Rh, Rw, wp, params["b_proj"], scale,
                              H, W, compute_dtype=compute_dtype,
                              out_dtype=x.dtype)
    return y.reshape(B, H, W, C)


# ----------------------------------------------------------------------------
# Pure-JAX reference (mirrors the PyTorch forward exactly)
# ----------------------------------------------------------------------------
def reference_forward(x, params, num_heads):
    B, H, W, C = x.shape
    hd = C // num_heads
    S = H * W
    scale = hd ** (-0.5)

    qkv = x.reshape(B, S, C) @ params["w_qkv"] + params["b_qkv"][0]
    qkv = qkv.reshape(B, S, 3, num_heads, hd).transpose(2, 0, 3, 1, 4)
    qkv = qkv.reshape(3, B * num_heads, S, hd)
    q, k, v = qkv[0], qkv[1], qkv[2]

    attn = (q * scale) @ jnp.swapaxes(k, -2, -1)

    Rh = get_rel_pos_jax(H, H, params["rel_pos_h"])
    Rw = get_rel_pos_jax(W, W, params["rel_pos_w"])
    r_q = q.reshape(B * num_heads, H, W, hd)
    rel_h = jnp.einsum("bhwc,hkc->bhwk", r_q, Rh)
    rel_w = jnp.einsum("bhwc,wkc->bhwk", r_q, Rw)
    attn = (attn.reshape(B * num_heads, H, W, H, W)
            + rel_h[:, :, :, :, None]
            + rel_w[:, :, :, None, :]).reshape(B * num_heads, S, S)

    attn = jax.nn.softmax(attn, axis=-1)
    out = (attn @ v).reshape(B, num_heads, H, W, hd).transpose(0, 2, 3, 1, 4)
    out = out.reshape(B, S, C) @ params["w_proj"] + params["b_proj"][0]
    return out.reshape(B, H, W, C)


# ----------------------------------------------------------------------------
if __name__ == "__main__":
    # Shapes consistent with Attention(dim=32, num_heads=4, use_rel_pos=True,
    #                                  input_size=(8, 8))
    B, H, W, C = 2, 8, 8, 32
    num_heads = 4
    hd = C // num_heads

    key = jax.random.PRNGKey(0)
    kx, k1, k2, k3, k4, k5, k6 = jax.random.split(key, 7)

    x = jax.random.normal(kx, (B, H, W, C), dtype=jnp.float32)
    params = {
        # nn.Linear(dim, 3*dim, bias=True), stored as (in, out)
        "w_qkv": 0.05 * jax.random.normal(k1, (C, 3 * C), dtype=jnp.float32),
        "b_qkv": 0.05 * jax.random.normal(k2, (1, 3 * C), dtype=jnp.float32),
        # nn.Linear(dim, dim)
        "w_proj": 0.05 * jax.random.normal(k3, (C, C), dtype=jnp.float32),
        "b_proj": 0.05 * jax.random.normal(k4, (1, C), dtype=jnp.float32),
        # rel_pos params are zero-initialized in the module; use small random
        # values here so the rel-pos path is actually exercised.
        "rel_pos_h": 0.05 * jax.random.normal(k5, (2 * H - 1, hd), dtype=jnp.float32),
        "rel_pos_w": 0.05 * jax.random.normal(k6, (2 * W - 1, hd), dtype=jnp.float32),
    }

    ref = reference_forward(x, params, num_heads)

    # f32 MXU path (approx-reciprocal normalization; otherwise exact math order).
    out32 = attention_forward(x, params, num_heads, compute_dtype=jnp.float32)
    out32 = jax.block_until_ready(out32)
    assert out32.shape == (B, H, W, C)
    assert jnp.allclose(out32, ref, rtol=2e-3, atol=2e-3), (
        f"f32 mismatch vs reference: max abs err = "
        f"{float(jnp.max(jnp.abs(out32 - ref)))}"
    )

    # default bf16 MXU-input path (f32 accumulation / f32 softmax statistics).
    out_bf16 = attention_forward(x, params, num_heads)
    out_bf16 = jax.block_until_ready(out_bf16)
    assert out_bf16.shape == (B, H, W, C)
    assert jnp.allclose(out_bf16, ref, rtol=5e-2, atol=5e-2), (
        f"bf16 mismatch vs reference: max abs err = "
        f"{float(jnp.max(jnp.abs(out_bf16 - ref)))}"
    )

    print("KERNEL_OK")
</pallas_src>

<mosaic_0001>
module attributes {stable_mosaic.version = 11 : i64} {
  func.func @_linear_kernel(%arg0: i32, %arg1: i32, %arg2: i32, %arg3: memref<128x32xf32, #tpu.memory_space<vmem>>, %arg4: memref<32x96xf32, #tpu.memory_space<vmem>>, %arg5: memref<1x96xf32, #tpu.memory_space<vmem>>, %arg6: memref<128x96xf32, #tpu.memory_space<vmem>>, %arg7: memref<128x96xf32, #tpu.memory_space<vmem>>) attributes {dimension_semantics = [#tpu.dimension_semantics<parallel>, #tpu.dimension_semantics<parallel>, #tpu.dimension_semantics<arbitrary>], iteration_bounds = array<i64: 1, 1, 1>, scalar_prefetch = 0 : i64, scratch_operands = 1 : i64, tpu.core_type = #tpu.core_type<tc>, window_params = [{transform_indices = @transform_0, window_bounds = array<i64: 128, 32>}, {transform_indices = @transform_1, window_bounds = array<i64: 32, 96>}, {transform_indices = @transform_2, window_bounds = array<i64: 1, 96>}, {transform_indices = @transform_3, window_bounds = array<i64: 128, 96>}]} {
    %c0_i32 = arith.constant 0 : i32
    %0 = arith.cmpi eq, %arg2, %c0_i32 : i32
    %1 = arith.extui %0 : i1 to i32
    %c0_i32_0 = arith.constant 0 : i32
    %2 = arith.cmpi ne, %1, %c0_i32_0 : i32
    scf.if %2 {
      %cst_10 = arith.constant 0.000000e+00 : f32
      %12 = vector.broadcast %cst_10 : f32 to vector<128x96xf32>
      %c0_11 = arith.constant 0 : index
      %c0_12 = arith.constant 0 : index
      %13 = vector.load %arg7[%c0_11, %c0_12] : memref<128x96xf32, #tpu.memory_space<vmem>>, vector<128x96xf32>
      tpu.vector_store %arg7[%c0_11, %c0_12], %12 {strides = array<i32>} : memref<128x96xf32, #tpu.memory_space<vmem>>, vector<128x96xf32>,
    } else {
    }
    %c0 = arith.constant 0 : index
    %c0_1 = arith.constant 0 : index
    %3 = vector.load %arg7[%c0, %c0_1] : memref<128x96xf32, #tpu.memory_space<vmem>>, vector<128x96xf32>
    %c0_2 = arith.constant 0 : index
    %c0_3 = arith.constant 0 : index
    %4 = vector.load %arg3[%c0_2, %c0_3] : memref<128x32xf32, #tpu.memory_space<vmem>>, vector<128x32xf32>
    %c0_4 = arith.constant 0 : index
    %c0_5 = arith.constant 0 : index
    %5 = vector.load %arg4[%c0_4, %c0_5] : memref<32x96xf32, #tpu.memory_space<vmem>>, vector<32x96xf32>
    %cst = arith.constant dense<0.000000e+00> : vector<128x96xf32>
    %6 = tpu.matmul %4, %5, %cst {dimension_numbers = #tpu.dot_dimension_numbers<[1], [0], [0], [1], [0, 0, 1, 1], [], []>} : vector<128x32xf32>, vector<32x96xf32>, vector<128x96xf32> -> vector<128x96xf32>
    %7 = arith.addf %3, %6 : vector<128x96xf32>
    %c0_6 = arith.constant 0 : index
    %c0_7 = arith.constant 0 : index
    %8 = vector.load %arg7[%c0_6, %c0_7] : memref<128x96xf32, #tpu.memory_space<vmem>>, vector<128x96xf32>
    tpu.vector_store %arg7[%c0_6, %c0_7], %7 {strides = array<i32>} : memref<128x96xf32, #tpu.memory_space<vmem>>, vector<128x96xf32>,
    %c0_i32_8 = arith.constant 0 : i32
    %9 = arith.cmpi eq, %arg2, %c0_i32_8 : i32
    %10 = arith.extui %9 : i1 to i32
    %c0_i32_9 = arith.constant 0 : i32
    %11 = arith.cmpi ne, %10, %c0_i32_9 : i32
    scf.if %11 {
      %c0_10 = arith.constant 0 : index
      %c0_11 = arith.constant 0 : index
      %12 = vector.load %arg7[%c0_10, %c0_11] : memref<128x96xf32, #tpu.memory_space<vmem>>, vector<128x96xf32>
      %c0_12 = arith.constant 0 : index
      %c0_13 = arith.constant 0 : index
      %13 = vector.load %arg5[%c0_12, %c0_13] : memref<1x96xf32, #tpu.memory_space<vmem>>, vector<1x96xf32>
      %14 = vector.broadcast %13 : vector<1x96xf32> to vector<128x96xf32>
      %15 = arith.addf %12, %14 : vector<128x96xf32>
      %c0_14 = arith.constant 0 : index
      %c0_15 = arith.constant 0 : index
      %16 = vector.load %arg6[%c0_14, %c0_15] : memref<128x96xf32, #tpu.memory_space<vmem>>, vector<128x96xf32>
      tpu.vector_store %arg6[%c0_14, %c0_15], %15 {strides = array<i32>} : memref<128x96xf32, #tpu.memory_space<vmem>>, vector<128x96xf32>,
    } else {
    }
    return
  }
  func.func @transform_0(%arg0: i32, %arg1: i32, %arg2: i32) -> (i32, i32) {
    %c0_i32 = arith.constant 0 : i32
    return %arg0, %arg2 : i32, i32
  }
  func.func @transform_1(%arg0: i32, %arg1: i32, %arg2: i32) -> (i32, i32) {
    %c0_i32 = arith.constant 0 : i32
    return %arg2, %arg1 : i32, i32
  }
  func.func @transform_2(%arg0: i32, %arg1: i32, %arg2: i32) -> (i32, i32) {
    %c0_i32 = arith.constant 0 : i32
    %c0_i32_0 = arith.constant 0 : i32
    return %c0_i32, %arg1 : i32, i32
  }
  func.func @transform_3(%arg0: i32, %arg1: i32, %arg2: i32) -> (i32, i32) {
    %c0_i32 = arith.constant 0 : i32
    return %arg0, %arg1 : i32, i32
  }
}

</mosaic_0001>

<llo_original>
// kernel: tpu_custom_call.1
$region0: #{tpu_custom_call.1}
  #allocation0 [shape = 'u32[]', space=smem, size = 0x4, offset = 0x4, fixed_abs, tag = 'smem constant byte address 0x4 - core index']
  #allocation1 [shape = 'u32[144,128]{1,0:T(1,128)}', space=vmem, size = 0x12000, scoped, tag = 'internal scratch']
  #allocation2 [shape = 'f32[128,96]{1,0:T(8,128)}', space=vmem, size = 0x10000, scoped, tag = 'scratch operand']
  %s0 = inlined_call_operand.hbm [shape: f32[128,32], index: 0, kind: input, shape index: {}]
  %s1 = inlined_call_operand.hbm [shape: f32[32,96], index: 1, kind: input, shape index: {}]
  %s2 = inlined_call_operand.hbm [shape: f32[1,96], index: 2, kind: input, shape index: {}]
  %s3 = inlined_call_operand.hbm [shape: f32[128,96], index: 3, kind: output, shape index: {}]
  %s4 = sld [smem:[#allocation0]]
  $region42: #{tpu_custom_call.1} parent=0
    _
  %s6 = ssub.s32 1, %s4
  %s7 = scalar_select 0, %s6, %s4
  $region1: #{tpu_custom_call.1} parent=0
    #allocation3 [shape = 'u8[65536]{0}', space=vmem, size = 0x10000, scoped, tag = 'input window, operand 0, single buffered']
    #allocation4 [shape = 's32[1]{0}', space=sflag, size = 0x4, scoped, tag = 'scoped memory for tpu_custom_call.1']
    #allocation5 [shape = 's32[1]{0}', space=sflag, size = 0x4, scoped, tag = 'scoped memory for tpu_custom_call.1']
    #allocation6 [shape = 'u8[16384]{0}', space=vmem, size = 0x4000, scoped, tag = 'input window, operand 1, single buffered']
    #allocation7 [shape = 's32[1]{0}', space=sflag, size = 0x4, scoped, tag = 'scoped memory for tpu_custom_call.1']
    #allocation8 [shape = 'u8[512]{0}', space=vmem, size = 0x400, scoped, tag = 'input window, operand 2, single buffered']
    #allocation9 [shape = 'u8[65536]{0}', space=vmem, size = 0x10000, scoped, tag = 'output window, operand 0, single buffered']
    %8 = vsyncpa [#allocation4], 0
    %9 = vsyncpa [#allocation7], 0
    %10 = vsyncpa [#allocation5], 0
    // Predicated region
    $region2: #{tpu_custom_call.1} parent=1 // pred_check
      _
    $region3: #{tpu_custom_call.1} parent=1 // pred_check_branch
      %12 = sbr.rel (0) target = $region5
    $region4: #{tpu_custom_call.1} parent=1 // pred_region
      %s14 = ssub.s32 2048, 2048
      %15 = vsyncadd [#allocation4], %s14
      %s16 = sshll.u32 [#allocation3], 4
      %s17 = int_to_ptr.vmem [resolvable:$true] %s16
      %22 = dma.hbm_to_vmem [thread:$0]  %s0, 2048, %s17, [#allocation4], 128, 128, 8
    $region5: #{tpu_custom_call.1} parent=1 // pred_fallthru
      _
    // Predicated region
    $region6: #{tpu_custom_call.1} parent=1 // pred_check
      _
    $region7: #{tpu_custom_call.1} parent=1 // pred_check_branch
      %24 = sbr.rel (0) target = $region9
    $region8: #{tpu_custom_call.1} parent=1 // pred_region
      %s26 = ssub.s32 512, 512
      %27 = vsyncadd [#allocation7], %s26
      %s28 = sshll.u32 [#allocation6], 4
      %s29 = int_to_ptr.vmem [resolvable:$true] %s28
      %34 = dma.hbm_to_vmem [thread:$0]  %s1, 512, %s29, [#allocation7], 128, 128, 8
    $region9: #{tpu_custom_call.1} parent=1 // pred_fallthru
      _
    // Predicated region
    $region10: #{tpu_custom_call.1} parent=1 // pred_check
      _
    $region11: #{tpu_custom_call.1} parent=1 // pred_check_branch
      %36 = sbr.rel (0) target = $region13
    $region12: #{tpu_custom_call.1} parent=1 // pred_region
      %s38 = ssub.s32 16, 16
      %39 = vsyncadd [#allocation7], %s38
      %s41 = sshll.u32 [#allocation8], 4
      %s42 = int_to_ptr.vmem [resolvable:$true] %s41
      %44 = dma.hbm_to_vmem [thread:$0]  %s2, 16, %s42, [#allocation7]
    $region13: #{tpu_custom_call.1} parent=1 // pred_fallthru
      _
    // Predicated region
    $region14: #{tpu_custom_call.1} parent=1 // pred_check
      _
    $region15: #{tpu_custom_call.1} parent=1 // pred_check_branch
      %46 = sbr.rel (0) target = $region17
    $region16: #{tpu_custom_call.1} parent=1 // pred_region
      %47 = dma.done [#allocation4], 2048
    $region17: #{tpu_custom_call.1} parent=1 // pred_fallthru
      _
    // Predicated region
    $region18: #{tpu_custom_call.1} parent=1 // pred_check
      _
    $region19: #{tpu_custom_call.1} parent=1 // pred_check_branch
      %49 = sbr.rel (0) target = $region21
    $region20: #{tpu_custom_call.1} parent=1 // pred_region
      %50 = dma.done [#allocation7], 512
    $region21: #{tpu_custom_call.1} parent=1 // pred_fallthru
      _
    // Predicated region
    $region22: #{tpu_custom_call.1} parent=1 // pred_check
      _
    $region23: #{tpu_custom_call.1} parent=1 // pred_check_branch
      %52 = sbr.rel (0) target = $region25
    $region24: #{tpu_custom_call.1} parent=1 // pred_region
      %53 = dma.done [#allocation7], 16
    $region25: #{tpu_custom_call.1} parent=1 // pred_fallthru
      _
    %p54 = scmp.eq.s32.totalorder 0, 0
    // Predicated region
    $region26: #{tpu_custom_call.1} parent=1 // pred_check
      %p55 = pneg %p54
    $region27: #{tpu_custom_call.1} parent=1 // pred_check_branch
      %57 = sbr.rel (%p55) target = $region29
    $region28: #{tpu_custom_call.1} parent=1 // pred_region
      %vm58 = vcmask 785408
      %59 = vst.msk [vmem:[#allocation2] sm:$0xff] %vm58, 0.0
      %60 = vst.msk [vmem:[#allocation2 + $0x8] sm:$0xff] %vm58, 0.0
      %61 = vst.msk [vmem:[#allocation2 + $0x10] sm:$0xff] %vm58, 0.0
      %62 = vst.msk [vmem:[#allocation2 + $0x18] sm:$0xff] %vm58, 0.0
      %63 = vst.msk [vmem:[#allocation2 + $0x20] sm:$0xff] %vm58, 0.0
      %64 = vst.msk [vmem:[#allocation2 + $0x28] sm:$0xff] %vm58, 0.0
      %65 = vst.msk [vmem:[#allocation2 + $0x30] sm:$0xff] %vm58, 0.0
      %66 = vst.msk [vmem:[#allocation2 + $0x38] sm:$0xff] %vm58, 0.0
      %67 = vst.msk [vmem:[#allocation2 + $0x40] sm:$0xff] %vm58, 0.0
      %68 = vst.msk [vmem:[#allocation2 + $0x48] sm:$0xff] %vm58, 0.0
      %69 = vst.msk [vmem:[#allocation2 + $0x50] sm:$0xff] %vm58, 0.0
      %70 = vst.msk [vmem:[#allocation2 + $0x58] sm:$0xff] %vm58, 0.0
      %71 = vst.msk [vmem:[#allocation2 + $0x60] sm:$0xff] %vm58, 0.0
      %72 = vst.msk [vmem:[#allocation2 + $0x68] sm:$0xff] %vm58, 0.0
      %73 = vst.msk [vmem:[#allocation2 + $0x70] sm:$0xff] %vm58, 0.0
      %74 = vst.msk [vmem:[#allocation2 + $0x78] sm:$0xff] %vm58, 0.0
    $region29: #{tpu_custom_call.1} parent=1 // pred_fallthru
      _
    %v75 = vld [vmem:[#allocation2] sm:$0xff]
    %v76 = vld [vmem:[#allocation2 + $0x8] sm:$0xff]
    %v77 = vld [vmem:[#allocation2 + $0x10] sm:$0xff]
    %v78 = vld [vmem:[#allocation2 + $0x18] sm:$0xff]
    %v79 = vld [vmem:[#allocation2 + $0x20] sm:$0xff]
    %v80 = vld [vmem:[#allocation2 + $0x28] sm:$0xff]
    %v81 = vld [vmem:[#allocation2 + $0x30] sm:$0xff]
    %v82 = vld [vmem:[#allocation2 + $0x38] sm:$0xff]
    %v83 = vld [vmem:[#allocation2 + $0x40] sm:$0xff]
    %v84 = vld [vmem:[#allocation2 + $0x48] sm:$0xff]
    %v85 = vld [vmem:[#allocation2 + $0x50] sm:$0xff]
    %v86 = vld [vmem:[#allocation2 + $0x58] sm:$0xff]
    %v87 = vld [vmem:[#allocation2 + $0x60] sm:$0xff]
    %v88 = vld [vmem:[#allocation2 + $0x68] sm:$0xff]
    %v89 = vld [vmem:[#allocation2 + $0x70] sm:$0xff]
    %v90 = vld [vmem:[#allocation2 + $0x78] sm:$0xff]
    %v91 = vld [vmem:[#allocation3] sm:$0xff]
    %v92 = vld [vmem:[#allocation3 + $0x8] sm:$0xff]
    %v93 = vld [vmem:[#allocation3 + $0x10] sm:$0xff]
    %v94 = vld [vmem:[#allocation3 + $0x18] sm:$0xff]
    %v95 = vld [vmem:[#allocation3 + $0x20] sm:$0xff]
    %v96 = vld [vmem:[#allocation3 + $0x28] sm:$0xff]
    %v97 = vld [vmem:[#allocation3 + $0x30] sm:$0xff]
    %v98 = vld [vmem:[#allocation3 + $0x38] sm:$0xff]
    %v99 = vld [vmem:[#allocation3 + $0x40] sm:$0xff]
    %v100 = vld [vmem:[#allocation3 + $0x48] sm:$0xff]
    %v101 = vld [vmem:[#allocation3 + $0x50] sm:$0xff]
    %v102 = vld [vmem:[#allocation3 + $0x58] sm:$0xff]
    %v103 = vld [vmem:[#allocation3 + $0x60] sm:$0xff]
    %v104 = vld [vmem:[#allocation3 + $0x68] sm:$0xff]
    %v105 = vld [vmem:[#allocation3 + $0x70] sm:$0xff]
    %v106 = vld [vmem:[#allocation3 + $0x78] sm:$0xff]
    %v107 = vld [vmem:[#allocation6] sm:$0xff]
    %v108 = vld [vmem:[#allocation6 + $0x8] sm:$0xff]
    %v109 = vld [vmem:[#allocation6 + $0x10] sm:$0xff]
    %v110 = vld [vmem:[#allocation6 + $0x18] sm:$0xff]
    %vm111 = vcmask 261120
    %v113 = vsel %vm111, %v91, 0
    %v116 = vsel %vm111, %v92, 0
    %v119 = vsel %vm111, %v93, 0
    %v122 = vsel %vm111, %v94, 0
    %v125 = vsel %vm111, %v95, 0
    %v128 = vsel %vm111, %v96, 0
    %v131 = vsel %vm111, %v97, 0
    %v134 = vsel %vm111, %v98, 0
    %v137 = vsel %vm111, %v99, 0
    %v140 = vsel %vm111, %v100, 0
    %v143 = vsel %vm111, %v101, 0
    %v146 = vsel %vm111, %v102, 0
    %v149 = vsel %vm111, %v103, 0
    %v152 = vsel %vm111, %v104, 0
    %v155 = vsel %vm111, %v105, 0
    %v158 = vsel %vm111, %v106, 0
    %160 = vmatprep.subr.mxu0 0.0
    %161 = vmatpush1.msra.mxu0 %v107
    %162 = vmatprep.subr.mxu0 0.0
    %163 = vmatpush1.msra.mxu0 %v108
    %164 = vmatprep.subr.mxu0 0.0
    %165 = vmatpush1.msra.mxu0 %v109
    %166 = vmatprep.subr.mxu0 0.0
    %167 = vmatpush1.msra.mxu0 %v110
    %168 = vmatprep.subr.mxu0 0.0
    %169 = vmatpush1.msra.mxu0 0.0
    %170 = vmatprep.subr.mxu0 0.0
    %171 = vmatpush1.msra.mxu0 0.0
    %172 = vmatprep.subr.mxu0 0.0
    %173 = vmatpush1.msra.mxu0 0.0
    %174 = vmatprep.subr.mxu0 0.0
    %175 = vmatpush1.msra.mxu0 0.0
    %176 = vmatprep.subr.mxu0 0.0
    %177 = vmatpush1.msra.mxu0 0.0
    %178 = vmatprep.subr.mxu0 0.0
    %179 = vmatpush1.msra.mxu0 0.0
    %180 = vmatprep.subr.mxu0 0.0
    %181 = vmatpush1.msra.mxu0 0.0
    %182 = vmatprep.subr.mxu0 0.0
    %183 = vmatpush1.msra.mxu0 0.0
    %184 = vmatprep.subr.mxu0 0.0
    %185 = vmatpush1.msra.mxu0 0.0
    %186 = vmatprep.subr.mxu0 0.0
    %187 = vmatpush1.msra.mxu0 0.0
    %188 = vmatprep.subr.mxu0 0.0
    %189 = vmatpush1.msra.mxu0 0.0
    %190 = vmatprep.subr.mxu0 0.0
    %191 = vmatpush1.msra.mxu0 0.0
    %192 = vmatprep.subr.mxu0 0.0
    %193 = vmatpush1.msra.mxu0 0.0
    %194 = vmatprep.subr.mxu0 0.0
    %195 = vmatpush1.msra.mxu0 0.0
    %196 = vmatprep.subr.mxu0 0.0
    %197 = vmatpush1.msra.mxu0 0.0
    %198 = vmatprep.subr.mxu0 0.0
    %199 = vmatpush1.msra.mxu0 0.0
    %200 = vmatprep.subr.mxu0 0.0
    %201 = vmatpush1.msra.mxu0 0.0
    %202 = vmatprep.subr.mxu0 0.0
    %203 = vmatpush1.msra.mxu0 0.0
    %204 = vmatprep.subr.mxu0 0.0
    %205 = vmatpush1.msra.mxu0 0.0
    %206 = vmatprep.subr.mxu0 0.0
    %207 = vmatpush1.msra.mxu0 0.0
    %208 = vmatprep.subr.mxu0 0.0
    %209 = vmatpush1.msra.mxu0 0.0
    %210 = vmatprep.subr.mxu0 0.0
    %211 = vmatpush1.msra.mxu0 0.0
    %212 = vmatprep.subr.mxu0 0.0
    %213 = vmatpush1.msra.mxu0 0.0
    %214 = vmatprep.subr.mxu0 0.0
    %215 = vmatpush1.msra.mxu0 0.0
    %216 = vmatprep.subr.mxu0 0.0
    %217 = vmatpush1.msra.mxu0 0.0
    %218 = vmatprep.subr.mxu0 0.0
    %219 = vmatpush1.msra.mxu0 0.0
    %220 = vmatprep.subr.mxu0 0.0
    %221 = vmatpush1.msra.mxu0 0.0
    %222 = vmatprep.subr.mxu0 0.0
    %223 = vmatpush1.msra.mxu0 0.0
    %224 = vmatprep.mubr.f32.mxu0 0.0
    %225 = vmatmul.mubr.f32.gmra.mrb[0].mxu0 %v113
    %v226 = vpop.f32.mrb[0].mxu0
    %v227 = vadd.f32 0.0, %v226
    %v228 = vpop.f32.mrb[0].mxu0
    %229 = vmatprep.mubr.f32.mxu0 0.0
    %230 = vmatmul.mubr.f32.gmra.mrb[0].mxu0 %v116
    %v231 = vpop.f32.mrb[0].mxu0
    %v232 = vadd.f32 0.0, %v231
    %v233 = vpop.f32.mrb[0].mxu0
    %234 = vmatprep.mubr.f32.mxu0 0.0
    %235 = vmatmul.mubr.f32.gmra.mrb[0].mxu0 %v119
    %v236 = vpop.f32.mrb[0].mxu0
    %v237 = vadd.f32 0.0, %v236
    %v238 = vpop.f32.mrb[0].mxu0
    %239 = vmatprep.mubr.f32.mxu0 0.0
    %240 = vmatmul.mubr.f32.gmra.mrb[0].mxu0 %v122
    %v241 = vpop.f32.mrb[0].mxu0
    %v242 = vadd.f32 0.0, %v241
    %v243 = vpop.f32.mrb[0].mxu0
    %244 = vmatprep.mubr.f32.mxu0 0.0
    %245 = vmatmul.mubr.f32.gmra.mrb[0].mxu0 %v125
    %v246 = vpop.f32.mrb[0].mxu0
    %v247 = vadd.f32 0.0, %v246
    %v248 = vpop.f32.mrb[0].mxu0
    %249 = vmatprep.mubr.f32.mxu0 0.0
    %250 = vmatmul.mubr.f32.gmra.mrb[0].mxu0 %v128
    %v251 = vpop.f32.mrb[0].mxu0
    %v252 = vadd.f32 0.0, %v251
    %v253 = vpop.f32.mrb[0].mxu0
    %254 = vmatprep.mubr.f32.mxu0 0.0
    %255 = vmatmul.mubr.f32.gmra.mrb[0].mxu0 %v131
    %v256 = vpop.f32.mrb[0].mxu0
    %v257 = vadd.f32 0.0, %v256
    %v258 = vpop.f32.mrb[0].mxu0
    %259 = vmatprep.mubr.f32.mxu0 0.0
    %260 = vmatmul.mubr.f32.gmra.mrb[0].mxu0 %v134
    %v261 = vpop.f32.mrb[0].mxu0
    %v262 = vadd.f32 0.0, %v261
    %v263 = vpop.f32.mrb[0].mxu0
    %264 = vmatprep.mubr.f32.mxu0 0.0
    %265 = vmatmul.mubr.f32.gmra.mrb[0].mxu0 %v137
    %v266 = vpop.f32.mrb[0].mxu0
    %v267 = vadd.f32 0.0, %v266
    %v268 = vpop.f32.mrb[0].mxu0
    %269 = vmatprep.mubr.f32.mxu0 0.0
    %270 = vmatmul.mubr.f32.gmra.mrb[0].mxu0 %v140
    %v271 = vpop.f32.mrb[0].mxu0
    %v272 = vadd.f32 0.0, %v271
    %v273 = vpop.f32.mrb[0].mxu0
    %274 = vmatprep.mubr.f32.mxu0 0.0
    %275 = vmatmul.mubr.f32.gmra.mrb[0].mxu0 %v143
    %v276 = vpop.f32.mrb[0].mxu0
    %v277 = vadd.f32 0.0, %v276
    %v278 = vpop.f32.mrb[0].mxu0
    %279 = vmatprep.mubr.f32.mxu0 0.0
    %280 = vmatmul.mubr.f32.gmra.mrb[0].mxu0 %v146
    %v281 = vpop.f32.mrb[0].mxu0
    %v282 = vadd.f32 0.0, %v281
    %v283 = vpop.f32.mrb[0].mxu0
    %284 = vmatprep.mubr.f32.mxu0 0.0
    %285 = vmatmul.mubr.f32.gmra.mrb[0].mxu0 %v149
    %v286 = vpop.f32.mrb[0].mxu0
    %v287 = vadd.f32 0.0, %v286
    %v288 = vpop.f32.mrb[0].mxu0
    %289 = vmatprep.mubr.f32.mxu0 0.0
    %290 = vmatmul.mubr.f32.gmra.mrb[0].mxu0 %v152
    %v291 = vpop.f32.mrb[0].mxu0
    %v292 = vadd.f32 0.0, %v291
    %v293 = vpop.f32.mrb[0].mxu0
    %294 = vmatprep.mubr.f32.mxu0 0.0
    %295 = vmatmul.mubr.f32.gmra.mrb[0].mxu0 %v155
    %v296 = vpop.f32.mrb[0].mxu0
    %v297 = vadd.f32 0.0, %v296
    %v298 = vpop.f32.mrb[0].mxu0
    %299 = vmatprep.mubr.f32.mxu0 0.0
    %300 = vmatmul.mubr.f32.gmra.mrb[0].mxu0 %v158
    %v301 = vpop.f32.mrb[0].mxu0
    %v302 = vadd.f32 0.0, %v301
    %v303 = vpop.f32.mrb[0].mxu0
    %304 = vdwg.mxu0
    %v305 = vadd.f32 %v75, %v227
    %v306 = vadd.f32 %v76, %v232
    %v307 = vadd.f32 %v77, %v237
    %v308 = vadd.f32 %v78, %v242
    %v309 = vadd.f32 %v79, %v247
    %v310 = vadd.f32 %v80, %v252
    %v311 = vadd.f32 %v81, %v257
    %v312 = vadd.f32 %v82, %v262
    %v313 = vadd.f32 %v83, %v267
    %v314 = vadd.f32 %v84, %v272
    %v315 = vadd.f32 %v85, %v277
    %v316 = vadd.f32 %v86, %v282
    %v317 = vadd.f32 %v87, %v287
    %v318 = vadd.f32 %v88, %v292
    %v319 = vadd.f32 %v89, %v297
    %v320 = vadd.f32 %v90, %v302
    %vm321 = vcmask 785408
    %322 = vst.msk [vmem:[#allocation2] sm:$0xff] %vm321, %v305
    %323 = vst.msk [vmem:[#allocation2 + $0x8] sm:$0xff] %vm321, %v306
    %324 = vst.msk [vmem:[#allocation2 + $0x10] sm:$0xff] %vm321, %v307
    %325 = vst.msk [vmem:[#allocation2 + $0x18] sm:$0xff] %vm321, %v308
    %326 = vst.msk [vmem:[#allocation2 + $0x20] sm:$0xff] %vm321, %v309
    %327 = vst.msk [vmem:[#allocation2 + $0x28] sm:$0xff] %vm321, %v310
    %328 = vst.msk [vmem:[#allocation2 + $0x30] sm:$0xff] %vm321, %v311
    %329 = vst.msk [vmem:[#allocation2 + $0x38] sm:$0xff] %vm321, %v312
    %330 = vst.msk [vmem:[#allocation2 + $0x40] sm:$0xff] %vm321, %v313
    %331 = vst.msk [vmem:[#allocation2 + $0x48] sm:$0xff] %vm321, %v314
    %332 = vst.msk [vmem:[#allocation2 + $0x50] sm:$0xff] %vm321, %v315
    %333 = vst.msk [vmem:[#allocation2 + $0x58] sm:$0xff] %vm321, %v316
    %334 = vst.msk [vmem:[#allocation2 + $0x60] sm:$0xff] %vm321, %v317
    %335 = vst.msk [vmem:[#allocation2 + $0x68] sm:$0xff] %vm321, %v318
    %336 = vst.msk [vmem:[#allocation2 + $0x70] sm:$0xff] %vm321, %v319
    %337 = vst.msk [vmem:[#allocation2 + $0x78] sm:$0xff] %vm321, %v320
    // Predicated region
    $region30: #{tpu_custom_call.1} parent=1 // pred_check
      %p338 = pneg %p54
    $region31: #{tpu_custom_call.1} parent=1 // pred_check_branch
      %340 = sbr.rel (%p338) target = $region33
    $region32: #{tpu_custom_call.1} parent=1 // pred_region
      %v341 = vld [vmem:[#allocation2] sm:$0xff]
      %v342 = vld [vmem:[#allocation2 + $0x8] sm:$0xff]
      %v343 = vld [vmem:[#allocation2 + $0x10] sm:$0xff]
      %v344 = vld [vmem:[#allocation2 + $0x18] sm:$0xff]
      %v345 = vld [vmem:[#allocation2 + $0x20] sm:$0xff]
      %v346 = vld [vmem:[#allocation2 + $0x28] sm:$0xff]
      %v347 = vld [vmem:[#allocation2 + $0x30] sm:$0xff]
      %v348 = vld [vmem:[#allocation2 + $0x38] sm:$0xff]
      %v349 = vld [vmem:[#allocation2 + $0x40] sm:$0xff]
      %v350 = vld [vmem:[#allocation2 + $0x48] sm:$0xff]
      %v351 = vld [vmem:[#allocation2 + $0x50] sm:$0xff]
      %v352 = vld [vmem:[#allocation2 + $0x58] sm:$0xff]
      %v353 = vld [vmem:[#allocation2 + $0x60] sm:$0xff]
      %v354 = vld [vmem:[#allocation2 + $0x68] sm:$0xff]
      %v355 = vld [vmem:[#allocation2 + $0x70] sm:$0xff]
      %v356 = vld [vmem:[#allocation2 + $0x78] sm:$0xff]
      %v357 = vld [vmem:[#allocation8] sm:$0x1]
      %v359 = vlaneseq
      %v360 = vshrl.u32 %v359, 7
      %v361 = vsub.s32 0, %v360
      %v362 = vrot.slane %v357, %v361
      %v364 = vadd.f32 %v341, %v362
      %v365 = vadd.f32 %v342, %v362
      %v366 = vadd.f32 %v343, %v362
      %v367 = vadd.f32 %v344, %v362
      %v368 = vadd.f32 %v345, %v362
      %v369 = vadd.f32 %v346, %v362
      %v370 = vadd.f32 %v347, %v362
      %v371 = vadd.f32 %v348, %v362
      %v372 = vadd.f32 %v349, %v362
      %v373 = vadd.f32 %v350, %v362
      %v374 = vadd.f32 %v351, %v362
      %v375 = vadd.f32 %v352, %v362
      %v376 = vadd.f32 %v353, %v362
      %v377 = vadd.f32 %v354, %v362
      %v378 = vadd.f32 %v355, %v362
      %v379 = vadd.f32 %v356, %v362
      %380 = vst.msk [vmem:[#allocation9] sm:$0xff] %vm321, %v364
      %381 = vst.msk [vmem:[#allocation9 + $0x8] sm:$0xff] %vm321, %v365
      %382 = vst.msk [vmem:[#allocation9 + $0x10] sm:$0xff] %vm321, %v366
      %383 = vst.msk [vmem:[#allocation9 + $0x18] sm:$0xff] %vm321, %v367
      %384 = vst.msk [vmem:[#allocation9 + $0x20] sm:$0xff] %vm321, %v368
      %385 = vst.msk [vmem:[#allocation9 + $0x28] sm:$0xff] %vm321, %v369
      %386 = vst.msk [vmem:[#allocation9 + $0x30] sm:$0xff] %vm321, %v370
      %387 = vst.msk [vmem:[#allocation9 + $0x38] sm:$0xff] %vm321, %v371
      %388 = vst.msk [vmem:[#allocation9 + $0x40] sm:$0xff] %vm321, %v372
      %389 = vst.msk [vmem:[#allocation9 + $0x48] sm:$0xff] %vm321, %v373
      %390 = vst.msk [vmem:[#allocation9 + $0x50] sm:$0xff] %vm321, %v374
      %391 = vst.msk [vmem:[#allocation9 + $0x58] sm:$0xff] %vm321, %v375
      %392 = vst.msk [vmem:[#allocation9 + $0x60] sm:$0xff] %vm321, %v376
      %393 = vst.msk [vmem:[#allocation9 + $0x68] sm:$0xff] %vm321, %v377
      %394 = vst.msk [vmem:[#allocation9 + $0x70] sm:$0xff] %vm321, %v378
      %395 = vst.msk [vmem:[#allocation9 + $0x78] sm:$0xff] %vm321, %v379
    $region33: #{tpu_custom_call.1} parent=1 // pred_fallthru
      _
    // Predicated region
    $region34: #{tpu_custom_call.1} parent=1 // pred_check
      _
    $region35: #{tpu_custom_call.1} parent=1 // pred_check_branch
      %397 = sbr.rel (0) target = $region37
    $region36: #{tpu_custom_call.1} parent=1 // pred_region
      %s399 = ssub.s32 2048, 2048
      %400 = vsyncadd [#allocation5], %s399
      %s401 = sshll.u32 [#allocation9], 4
      %s402 = int_to_ptr.vmem [resolvable:$true] %s401
      %407 = dma.vmem_to_hbm [thread:$0]  %s402, 2048, %s3, [#allocation5], 128, 128, 8
    $region37: #{tpu_custom_call.1} parent=1 // pred_fallthru
      _
    // Predicated region
    $region38: #{tpu_custom_call.1} parent=1 // pred_check
      _
    $region39: #{tpu_custom_call.1} parent=1 // pred_check_branch
      %409 = sbr.rel (0) target = $region41
    $region40: #{tpu_custom_call.1} parent=1 // pred_region
      %410 = dma.done [#allocation5], 2048
    $region41: #{tpu_custom_call.1} parent=1 // pred_fallthru
      _
    %411 = vsyncpa [#allocation4], 1
    %412 = vsyncpa [#allocation7], 1
    %413 = vsyncpa [#allocation5], 1

</llo_original>
